<compile_context>
chip_gen: v6e
topology: v6e:2x2x1
jax: 0.10.0
libtpu: 0.0.40
codegen_flags: <defaults>
</compile_context>

<pallas_src>
import math

import jax
import jax.numpy as jnp
from jax import lax
from jax.experimental import pallas as pl
from jax.experimental.pallas import tpu as pltpu

HIDDEN = 320                       # true hidden size (PyTorch semantics)
HPAD = 384                         # per-gate padded width (multiple of 128)
GPAD = 4 * HPAD                    # packed padded gate width
FC_DIMS = [HIDDEN, 160, 160, 80, 20, 5, 1]


# -------------------- kernel 1: hoisted input projection ---------------------
def proj_kernel(x_ref, w_ref, b_ref, o_ref):
    # (T*B, I) @ (I, 4*HPAD) + (1, 4*HPAD)  -- one large MXU matmul
    o_ref[...] = (
        jnp.dot(x_ref[...], w_ref[...], preferred_element_type=jnp.float32)
        + b_ref[...]
    )


def input_projection(x2d_bf16, w_ih0_bf16, b0_f32):
    TB = x2d_bf16.shape[0]
    G = w_ih0_bf16.shape[1]
    return pl.pallas_call(
        proj_kernel,
        out_shape=jax.ShapeDtypeStruct((TB, G), jnp.float32),
        in_specs=[pl.BlockSpec(memory_space=pltpu.MemorySpace.VMEM)] * 3,
        out_specs=pl.BlockSpec(memory_space=pltpu.MemorySpace.VMEM),
    )(x2d_bf16, w_ih0_bf16, b0_f32)


# ---------------- kernel 2: fused multi-layer LSTM + MLP head ----------------
def fused_lstm_mlp_kernel(gx_ref, whh_ref, wih_ref, brest_ref,
                          w1, b1, w2, b2, w3, b3, w4, b4, w5, b5, w6, b6,
                          out_ref):
    T, B, _ = gx_ref.shape
    L, Hp, _ = whh_ref.shape
    mdt = whh_ref.dtype                      # bf16 matmul dtype

    def hsig(z):                             # sigmoid via a single tanh (1 EUP op)
        return 0.5 * jnp.tanh(0.5 * z) + 0.5

    def cell(gates, c):
        # PyTorch gate order i, f, g, o; slices are 128-lane aligned (Hp = 384).
        i_g = hsig(gates[:, 0 * Hp:1 * Hp])
        f_g = hsig(gates[:, 1 * Hp:2 * Hp])
        g_g = jnp.tanh(gates[:, 2 * Hp:3 * Hp])
        o_g = hsig(gates[:, 3 * Hp:4 * Hp])
        c_new = f_g * c + i_g * g_g
        h_new = o_g * jnp.tanh(c_new)
        return h_new, c_new

    def step(t, carry):
        hs, cs = carry                       # tuples of L x (B, Hp) f32
        new_h, new_c = [], []
        for l in range(L):                   # static unrolled layer loop
            if l == 0:
                gx = gx_ref[t]               # precomputed x_t @ W_ih0 + b0
            else:
                gx = (jnp.dot(new_h[l - 1].astype(mdt), wih_ref[l - 1],
                              preferred_element_type=jnp.float32)
                      + brest_ref[l - 1])
            gates = gx + jnp.dot(hs[l].astype(mdt), whh_ref[l],
                                 preferred_element_type=jnp.float32)
            h_n, c_n = cell(gates, cs[l])
            new_h.append(h_n)
            new_c.append(c_n)
        return tuple(new_h), tuple(new_c)

    zeros = jnp.zeros((B, Hp), jnp.float32)
    init = (tuple(zeros for _ in range(L)), tuple(zeros for _ in range(L)))
    hs, _ = lax.fori_loop(0, T, step, init, unroll=(T <= 8))

    # ---- fused MLP head on the last layer's final hidden state ----
    h = hs[L - 1]                            # (B, Hp); padded lanes are exactly 0
    for w, b in ((w1, b1), (w2, b2), (w3, b3), (w4, b4), (w5, b5)):
        h = jnp.maximum(
            jnp.dot(h, w[...], preferred_element_type=jnp.float32) + b[...], 0.0)
    out_ref[...] = jnp.dot(h, w6[...], preferred_element_type=jnp.float32) + b6[...]


def fused_lstm_mlp(gx, whh, wih, brest, fc_params):
    T, B, _ = gx.shape
    flat_fc = []
    for w, b in fc_params:
        flat_fc += [w, b]
    n_in = 4 + len(flat_fc)
    return pl.pallas_call(
        fused_lstm_mlp_kernel,
        out_shape=jax.ShapeDtypeStruct((B, 1), jnp.float32),
        in_specs=[pl.BlockSpec(memory_space=pltpu.MemorySpace.VMEM)] * n_in,
        out_specs=pl.BlockSpec(memory_space=pltpu.MemorySpace.VMEM),
    )(gx, whh, wih, brest, *flat_fc)


# --------------------------- parameter construction ---------------------------
def init_params(key, input_size, num_layer):
    """Canonical (PyTorch-equivalent) params: weights pre-transposed to
    (in_features, out_features), biases combined b_ih + b_hh."""
    lstm_params = []
    k = 1.0 / math.sqrt(HIDDEN)
    for layer in range(num_layer):
        in_dim = input_size if layer == 0 else HIDDEN
        key, k1, k2, k3, k4 = jax.random.split(key, 5)
        w_ih_t = jax.random.uniform(k1, (in_dim, 4 * HIDDEN), jnp.float32, -k, k)
        w_hh_t = jax.random.uniform(k2, (HIDDEN, 4 * HIDDEN), jnp.float32, -k, k)
        b_ih = jax.random.uniform(k3, (4 * HIDDEN,), jnp.float32, -k, k)
        b_hh = jax.random.uniform(k4, (4 * HIDDEN,), jnp.float32, -k, k)
        lstm_params.append((w_ih_t, w_hh_t, (b_ih + b_hh).reshape(1, 4 * HIDDEN)))

    fc_params = []
    for d_in, d_out in zip(FC_DIMS[:-1], FC_DIMS[1:]):
        key, k1, k2 = jax.random.split(key, 3)
        kk = 1.0 / math.sqrt(d_in)
        w_t = jax.random.uniform(k1, (d_in, d_out), jnp.float32, -kk, kk)
        b = jax.random.uniform(k2, (1, d_out), jnp.float32, -kk, kk)
        fc_params.append((w_t, b))
    return lstm_params, fc_params


def _pad_gate_cols(a, h=HIDDEN, hp=HPAD):
    """(..., 4h) -> (..., 4hp): zero-pad each gate block to a 128-lane multiple."""
    parts = []
    for g in range(4):
        blk = a[..., g * h:(g + 1) * h]
        pad = [(0, 0)] * (a.ndim - 1) + [(0, hp - h)]
        parts.append(jnp.pad(blk, pad))
    return jnp.concatenate(parts, axis=-1)


def _pad_rows(a, hp=HPAD):
    return jnp.pad(a, ((0, hp - a.shape[0]), (0, 0)))


def prepare_kernel_params(lstm_params, fc_params):
    """Build padded / bf16 kernel-side parameters from canonical ones."""
    w_ih0_t, _, bias0 = lstm_params[0]
    w_ih0_p = _pad_gate_cols(w_ih0_t).astype(jnp.bfloat16)     # (I, 4*HPAD)
    b0_p = _pad_gate_cols(bias0)                               # (1, 4*HPAD) f32

    whh_list, wih_rest, b_rest = [], [], []
    for l, (w_ih_t, w_hh_t, bias) in enumerate(lstm_params):
        whh_list.append(_pad_gate_cols(_pad_rows(w_hh_t)).astype(jnp.bfloat16))
        if l > 0:
            wih_rest.append(_pad_gate_cols(_pad_rows(w_ih_t)).astype(jnp.bfloat16))
            b_rest.append(_pad_gate_cols(bias))
    whh = jnp.stack(whh_list)                                  # (L, HPAD, 4*HPAD)
    if wih_rest:
        wih = jnp.stack(wih_rest)                              # (L-1, HPAD, 4*HPAD)
        brest = jnp.stack(b_rest)                              # (L-1, 1, 4*HPAD)
    else:                                                      # single-layer case
        wih = jnp.zeros((1, HPAD, GPAD), jnp.bfloat16)
        brest = jnp.zeros((1, 1, GPAD), jnp.float32)

    fc_p = []
    for idx, (w, b) in enumerate(fc_params):
        if idx == 0:
            w = _pad_rows(w)                                   # (HPAD, 160)
        fc_p.append((w, b))
    return w_ih0_p, b0_p, whh, wih, brest, fc_p


# ----------------------------------- forward ----------------------------------
def lstm2_forward(x, kernel_params):
    """x: (batch, seq, input_size), batch_first like PyTorch. Returns (batch, 1)."""
    w_ih0_p, b0_p, whh, wih, brest, fc_p = kernel_params
    B, T, I = x.shape
    # layout glue only: (B,T,I) -> (T,B,I) -> (T*B,I); all compute lives in kernels
    x2d = jnp.transpose(x, (1, 0, 2)).reshape(T * B, I).astype(jnp.bfloat16)
    gx = input_projection(x2d, w_ih0_p, b0_p).reshape(T, B, GPAD)
    return fused_lstm_mlp(gx, whh, wih, brest, fc_p)


# -------------------------- pure-JAX f32 reference ----------------------------
def reference_forward(x, lstm_params, fc_params):
    xt = jnp.transpose(x, (1, 0, 2)).astype(jnp.float32)
    for w_ih_t, w_hh_t, bias in lstm_params:
        T, B, _ = xt.shape
        h = jnp.zeros((B, HIDDEN), jnp.float32)
        c = jnp.zeros((B, HIDDEN), jnp.float32)
        outs = []
        for t in range(T):
            gates = xt[t] @ w_ih_t + h @ w_hh_t + bias
            i_g = jax.nn.sigmoid(gates[:, :HIDDEN])
            f_g = jax.nn.sigmoid(gates[:, HIDDEN:2 * HIDDEN])
            g_g = jnp.tanh(gates[:, 2 * HIDDEN:3 * HIDDEN])
            o_g = jax.nn.sigmoid(gates[:, 3 * HIDDEN:])
            c = f_g * c + i_g * g_g
            h = o_g * jnp.tanh(c)
            outs.append(h)
        xt = jnp.stack(outs, axis=0)
    out = xt[-1]
    for idx, (w, b) in enumerate(fc_params):
        out = out @ w + b
        if idx < len(fc_params) - 1:
            out = jnp.maximum(out, 0.0)
    return out


if __name__ == "__main__":
    # batch == seq (required by the module's h_0 = zeros(L, x.size(1), H) quirk);
    # batch = 8 fills the sublane dimension.
    batch, seq, input_size, num_layer = 8, 8, 16, 2
    drop = 0.0  # inference: dropout inactive

    key = jax.random.PRNGKey(0)
    kx, kp = jax.random.split(key)
    x = jax.random.normal(kx, (batch, seq, input_size), dtype=jnp.float32)

    lstm_params, fc_params = init_params(kp, input_size, num_layer)
    kernel_params = prepare_kernel_params(lstm_params, fc_params)

    out = lstm2_forward(x, kernel_params)
    out = jax.block_until_ready(out)

    ref = reference_forward(x, lstm_params, fc_params)
    assert out.shape == (batch, 1), out.shape
    # bf16 MXU matmuls vs f32 reference -> modest tolerance
    assert jnp.allclose(out, ref, rtol=3e-2, atol=3e-2), (out, ref)

    print("KERNEL_OK")
</pallas_src>

<mosaic_0001>
module attributes {stable_mosaic.version = 11 : i64} {
  func.func @proj_kernel(%arg0: memref<64x16xbf16, #tpu.memory_space<vmem>>, %arg1: memref<16x1536xbf16, #tpu.memory_space<vmem>>, %arg2: memref<1x1536xf32, #tpu.memory_space<vmem>>, %arg3: memref<64x1536xf32, #tpu.memory_space<vmem>>) attributes {dimension_semantics = [], scalar_prefetch = 0 : i64, scratch_operands = 0 : i64, tpu.core_type = #tpu.core_type<tc>} {
    %c0 = arith.constant 0 : index
    %c0_0 = arith.constant 0 : index
    %0 = vector.load %arg0[%c0, %c0_0] : memref<64x16xbf16, #tpu.memory_space<vmem>>, vector<64x16xbf16>
    %c0_1 = arith.constant 0 : index
    %c0_2 = arith.constant 0 : index
    %1 = vector.load %arg1[%c0_1, %c0_2] : memref<16x1536xbf16, #tpu.memory_space<vmem>>, vector<16x1536xbf16>
    %cst = arith.constant dense<0.000000e+00> : vector<64x1536xf32>
    %2 = tpu.matmul %0, %1, %cst {dimension_numbers = #tpu.dot_dimension_numbers<[1], [0], [0], [1], [0, 0, 1, 1], [], []>} : vector<64x16xbf16>, vector<16x1536xbf16>, vector<64x1536xf32> -> vector<64x1536xf32>
    %c0_3 = arith.constant 0 : index
    %c0_4 = arith.constant 0 : index
    %3 = vector.load %arg2[%c0_3, %c0_4] : memref<1x1536xf32, #tpu.memory_space<vmem>>, vector<1x1536xf32>
    %4 = vector.broadcast %3 : vector<1x1536xf32> to vector<64x1536xf32>
    %5 = arith.addf %2, %4 : vector<64x1536xf32>
    %c0_5 = arith.constant 0 : index
    %c0_6 = arith.constant 0 : index
    %6 = vector.load %arg3[%c0_5, %c0_6] : memref<64x1536xf32, #tpu.memory_space<vmem>>, vector<64x1536xf32>
    tpu.vector_store %arg3[%c0_5, %c0_6], %5 {strides = array<i32>} : memref<64x1536xf32, #tpu.memory_space<vmem>>, vector<64x1536xf32>,
    return
  }
}

</mosaic_0001>

<llo_original>
// kernel: tpu_custom_call.1
$region0: #{tpu_custom_call.1}
  #allocation0 [shape = 'u32[]', space=smem, size = 0x4, offset = 0x4, fixed_abs, tag = 'smem constant byte address 0x4 - core index']
  #allocation1 [shape = 'u32[144,128]{1,0:T(1,128)}', space=vmem, size = 0x12000, scoped, tag = 'internal scratch']
  %s0 = inlined_call_operand.vmem [shape: bf16[64,16], index: 0, kind: input, shape index: {}]
  %s1 = inlined_call_operand.hbm [shape: bf16[16,1536], index: 1, kind: input, shape index: {}]
  %s2 = inlined_call_operand.vmem [shape: f32[1,1536], index: 2, kind: input, shape index: {}]
  %s3 = inlined_call_operand.hbm [shape: f32[64,1536], index: 3, kind: output, shape index: {}]
  %s4 = sld [smem:[#allocation0]]
  $region26: #{tpu_custom_call.1} parent=0
    _
  %s6 = ssub.s32 1, %s4
  %s7 = scalar_select 0, %s6, %s4
  $region1: #{tpu_custom_call.1} parent=0
    #allocation2 [shape = 'u8[49152]{0}', space=vmem, size = 0xc000, scoped, tag = 'input window, operand 1, single buffered']
    #allocation3 [shape = 's32[1]{0}', space=sflag, size = 0x4, scoped, tag = 'scoped memory for tpu_custom_call.1']
    #allocation4 [shape = 's32[1]{0}', space=sflag, size = 0x4, scoped, tag = 'scoped memory for tpu_custom_call.1']
    #allocation5 [shape = 'u8[393216]{0}', space=vmem, size = 0x60000, scoped, tag = 'output window, operand 0, single buffered']
    %8 = vsyncpa [#allocation3], 0
    %9 = vsyncpa [#allocation4], 0
    // Predicated region
    $region2: #{tpu_custom_call.1} parent=1 // pred_check
      _
    $region3: #{tpu_custom_call.1} parent=1 // pred_check_branch
      %11 = sbr.rel (0) target = $region5
    $region4: #{tpu_custom_call.1} parent=1 // pred_region
      _
    $region5: #{tpu_custom_call.1} parent=1 // pred_fallthru
      _
    // Predicated region
    $region6: #{tpu_custom_call.1} parent=1 // pred_check
      _
    $region7: #{tpu_custom_call.1} parent=1 // pred_check_branch
      %13 = sbr.rel (0) target = $region9
    $region8: #{tpu_custom_call.1} parent=1 // pred_region
      %s15 = ssub.s32 1536, 1536
      %16 = vsyncadd [#allocation3], %s15
      %s17 = sshll.u32 [#allocation2], 4
      %s18 = int_to_ptr.vmem [resolvable:$true] %s17
      %23 = dma.hbm_to_vmem [thread:$0]  %s1, 1536, %s18, [#allocation3], 768, 768, 48
    $region9: #{tpu_custom_call.1} parent=1 // pred_fallthru
      _
    // Predicated region
    $region10: #{tpu_custom_call.1} parent=1 // pred_check
      _
    $region11: #{tpu_custom_call.1} parent=1 // pred_check_branch
      %25 = sbr.rel (0) target = $region13
    $region12: #{tpu_custom_call.1} parent=1 // pred_region
      _
    $region13: #{tpu_custom_call.1} parent=1 // pred_fallthru
      _
    // Predicated region
    $region14: #{tpu_custom_call.1} parent=1 // pred_check
      _
    $region15: #{tpu_custom_call.1} parent=1 // pred_check_branch
      %27 = sbr.rel (0) target = $region17
    $region16: #{tpu_custom_call.1} parent=1 // pred_region
      %28 = dma.done [#allocation3], 1536
    $region17: #{tpu_custom_call.1} parent=1 // pred_fallthru
      _
    %v30 = vld [vmem:[%s0] sm:$0xf]
    %v31 = vld [vmem:[%s0 + $0x4] sm:$0xf]
    %v32 = vld [vmem:[%s0 + $0x8] sm:$0xf]
    %v33 = vld [vmem:[%s0 + $0xc] sm:$0xf]
    %v34 = vld [vmem:[%s0 + $0x10] sm:$0xf]
    %v35 = vld [vmem:[%s0 + $0x14] sm:$0xf]
    %v36 = vld [vmem:[%s0 + $0x18] sm:$0xf]
    %v37 = vld [vmem:[%s0 + $0x1c] sm:$0xf]
    %v38 = vld [vmem:[#allocation2] sm:$0xff]
    %v39 = vld [vmem:[#allocation2 + $0x8] sm:$0xff]
    %v40 = vld [vmem:[#allocation2 + $0x10] sm:$0xff]
    %v41 = vld [vmem:[#allocation2 + $0x18] sm:$0xff]
    %v42 = vld [vmem:[#allocation2 + $0x20] sm:$0xff]
    %v43 = vld [vmem:[#allocation2 + $0x28] sm:$0xff]
    %v44 = vld [vmem:[#allocation2 + $0x30] sm:$0xff]
    %v45 = vld [vmem:[#allocation2 + $0x38] sm:$0xff]
    %v46 = vld [vmem:[#allocation2 + $0x40] sm:$0xff]
    %v47 = vld [vmem:[#allocation2 + $0x48] sm:$0xff]
    %v48 = vld [vmem:[#allocation2 + $0x50] sm:$0xff]
    %v49 = vld [vmem:[#allocation2 + $0x58] sm:$0xff]
    %v50 = vld [vmem:[%s2] sm:$0xff]
    %v51 = vld [vmem:[%s2 + $0x8] sm:$0xf]
    %v54 = vlaneseq
    %v55 = vshrl.u32 %v54, 7
    %v56 = vsub.s32 0, %v55
    %v57 = vrot.slane %v50, %v56
    %v58 = vlaneseq
    %v59 = vshrl.u32 %v58, 7
    %v60 = vsub.s32 1, %v59
    %v61 = vrot.slane %v50, %v60
    %v62 = vlaneseq
    %v63 = vshrl.u32 %v62, 7
    %v64 = vsub.s32 2, %v63
    %v65 = vrot.slane %v50, %v64
    %v66 = vlaneseq
    %v67 = vshrl.u32 %v66, 7
    %v68 = vsub.s32 3, %v67
    %v69 = vrot.slane %v50, %v68
    %v70 = vlaneseq
    %v71 = vshrl.u32 %v70, 7
    %v72 = vsub.s32 4, %v71
    %v73 = vrot.slane %v50, %v72
    %v74 = vlaneseq
    %v75 = vshrl.u32 %v74, 7
    %v76 = vsub.s32 5, %v75
    %v77 = vrot.slane %v50, %v76
    %v78 = vlaneseq
    %v79 = vshrl.u32 %v78, 7
    %v80 = vsub.s32 6, %v79
    %v81 = vrot.slane %v50, %v80
    %v82 = vlaneseq
    %v83 = vshrl.u32 %v82, 7
    %v84 = vsub.s32 7, %v83
    %v85 = vrot.slane %v50, %v84
    %v86 = vlaneseq
    %v87 = vshrl.u32 %v86, 7
    %v88 = vsub.s32 0, %v87
    %v89 = vrot.slane %v51, %v88
    %v90 = vlaneseq
    %v91 = vshrl.u32 %v90, 7
    %v92 = vsub.s32 1, %v91
    %v93 = vrot.slane %v51, %v92
    %v94 = vlaneseq
    %v95 = vshrl.u32 %v94, 7
    %v96 = vsub.s32 2, %v95
    %v97 = vrot.slane %v51, %v96
    %v98 = vlaneseq
    %v99 = vshrl.u32 %v98, 7
    %v100 = vsub.s32 3, %v99
    %v101 = vrot.slane %v51, %v100
    %v122 = vunpack.c.l.b16 %v30
    %v123 = vunpack.c.l.b16 %v31
    %v124 = vunpack.c.l.b16 %v32
    %v125 = vunpack.c.l.b16 %v33
    %v126 = vunpack.c.l.b16 %v34
    %v127 = vunpack.c.l.b16 %v35
    %v128 = vunpack.c.l.b16 %v36
    %v129 = vunpack.c.l.b16 %v37
    %v130 = vpack.c.b16 %v123, %v122
    %v131 = vpack.c.b16 %v125, %v124
    %v132 = vpack.c.b16 %v127, %v126
    %v133 = vpack.c.b16 %v129, %v128
    %v146 = vunpack.c.l.b16 %v38
    %v147 = vunpack.c.h.b16 %v38
    %v148 = vunpack.c.l.b16 %v39
    %v149 = vunpack.c.h.b16 %v39
    %v150 = vunpack.c.l.b16 %v40
    %v151 = vunpack.c.h.b16 %v40
    %v152 = vunpack.c.l.b16 %v41
    %v153 = vunpack.c.h.b16 %v41
    %v154 = vunpack.c.l.b16 %v42
    %v155 = vunpack.c.h.b16 %v42
    %v156 = vunpack.c.l.b16 %v43
    %v157 = vunpack.c.h.b16 %v43
    %v158 = vunpack.c.l.b16 %v44
    %v159 = vunpack.c.h.b16 %v44
    %v160 = vunpack.c.l.b16 %v45
    %v161 = vunpack.c.h.b16 %v45
    %v162 = vunpack.c.l.b16 %v46
    %v163 = vunpack.c.h.b16 %v46
    %v164 = vunpack.c.l.b16 %v47
    %v165 = vunpack.c.h.b16 %v47
    %v166 = vunpack.c.l.b16 %v48
    %v167 = vunpack.c.h.b16 %v48
    %v168 = vunpack.c.l.b16 %v49
    %v169 = vunpack.c.h.b16 %v49
    %v170 = vpack.c.b16 %v158, %v146
    %v171 = vpack.c.b16 %v159, %v147
    %v172 = vpack.c.b16 %v160, %v148
    %v173 = vpack.c.b16 %v161, %v149
    %v174 = vpack.c.b16 %v162, %v150
    %v175 = vpack.c.b16 %v163, %v151
    %v176 = vpack.c.b16 %v164, %v152
    %v177 = vpack.c.b16 %v165, %v153
    %v178 = vpack.c.b16 %v166, %v154
    %v179 = vpack.c.b16 %v167, %v155
    %v180 = vpack.c.b16 %v168, %v156
    %v181 = vpack.c.b16 %v169, %v157
    %vm194 = vcmask 130048
    %v196 = vsel %vm194, %v130, 0
    %v199 = vsel %vm194, %v131, 0
    %v202 = vsel %vm194, %v132, 0
    %v205 = vsel %vm194, %v133, 0
    %207 = vmatprep.subr.bf16.mxu0 0
    %208 = vmatpush1.bf16.msra.mxu0 0
    %209 = vmatprep.subr.bf16.mxu0 0
    %210 = vmatpush1.bf16.msra.mxu0 0
    %211 = vmatprep.subr.bf16.mxu0 0
    %212 = vmatpush1.bf16.msra.mxu0 0
    %213 = vmatprep.subr.bf16.mxu0 0
    %214 = vmatpush1.bf16.msra.mxu0 0
    %215 = vmatprep.subr.bf16.mxu0 0
    %216 = vmatpush1.bf16.msra.mxu0 0
    %217 = vmatprep.subr.bf16.mxu0 0
    %218 = vmatpush1.bf16.msra.mxu0 0
    %219 = vmatprep.subr.bf16.mxu0 0
    %220 = vmatpush1.bf16.msra.mxu0 0
    %221 = vmatprep.subr.bf16.mxu0 %v171
    %222 = vmatpush1.bf16.msra.mxu0 %v170
    %223 = vmatprep.subr.bf16.mxu0 0
    %224 = vmatpush2.bf16.msra.mxu0 0
    %225 = vmatprep.subr.bf16.mxu0 0
    %226 = vmatpush2.bf16.msra.mxu0 0
    %227 = vmatprep.subr.bf16.mxu0 0
    %228 = vmatpush2.bf16.msra.mxu0 0
    %229 = vmatprep.subr.bf16.mxu0 0
    %230 = vmatpush2.bf16.msra.mxu0 0
    %231 = vmatprep.subr.bf16.mxu0 0
    %232 = vmatpush2.bf16.msra.mxu0 0
    %233 = vmatprep.subr.bf16.mxu0 0
    %234 = vmatpush2.bf16.msra.mxu0 0
    %235 = vmatprep.subr.bf16.mxu0 0
    %236 = vmatpush2.bf16.msra.mxu0 0
    %237 = vmatprep.subr.bf16.mxu0 0
    %238 = vmatpush2.bf16.msra.mxu0 0
    %239 = vmatprep.mubr.bf16.mxu0 0
    %240 = vmatmul.mubr.bf16.gmra.mxu0 %v196
    %v241 = vpop.f32.mrf.mxu0
    %v242 = vadd.f32 %v57, %v241
    %v243 = vpop.f32.mrf.mxu0
    %v244 = vadd.f32 %v61, %v243
    %v245 = vpop.f32.mrf.mxu0
    %v246 = vadd.f32 %v57, %v245
    %v247 = vpop.f32.mrf.mxu0
    %v248 = vadd.f32 %v61, %v247
    %249 = vmatprep.mubr.bf16.mxu0 0
    %250 = vmatmul.mubr.bf16.gmra.mxu0 %v199
    %v251 = vpop.f32.mrf.mxu0
    %v252 = vadd.f32 %v57, %v251
    %v253 = vpop.f32.mrf.mxu0
    %v254 = vadd.f32 %v61, %v253
    %v255 = vpop.f32.mrf.mxu0
    %v256 = vadd.f32 %v57, %v255
    %v257 = vpop.f32.mrf.mxu0
    %v258 = vadd.f32 %v61, %v257
    %259 = vmatprep.mubr.bf16.mxu0 0
    %260 = vmatmul.mubr.bf16.gmra.mxu0 %v202
    %v261 = vpop.f32.mrf.mxu0
    %v262 = vadd.f32 %v57, %v261
    %v263 = vpop.f32.mrf.mxu0
    %v264 = vadd.f32 %v61, %v263
    %v265 = vpop.f32.mrf.mxu0
    %v266 = vadd.f32 %v57, %v265
    %v267 = vpop.f32.mrf.mxu0
    %v268 = vadd.f32 %v61, %v267
    %269 = vmatprep.mubr.bf16.mxu0 0
    %270 = vmatmul.mubr.bf16.gmra.mxu0 %v205
    %v271 = vpop.f32.mrf.mxu0
    %v272 = vadd.f32 %v57, %v271
    %v273 = vpop.f32.mrf.mxu0
    %v274 = vadd.f32 %v61, %v273
    %v275 = vpop.f32.mrf.mxu0
    %v276 = vadd.f32 %v57, %v275
    %v277 = vpop.f32.mrf.mxu0
    %v278 = vadd.f32 %v61, %v277
    %279 = vdwg.mxu0
    %280 = vmatprep.subr.bf16.mxu0 0
    %281 = vmatpush1.bf16.msra.mxu0 0
    %282 = vmatprep.subr.bf16.mxu0 0
    %283 = vmatpush1.bf16.msra.mxu0 0
    %284 = vmatprep.subr.bf16.mxu0 0
    %285 = vmatpush1.bf16.msra.mxu0 0
    %286 = vmatprep.subr.bf16.mxu0 0
    %287 = vmatpush1.bf16.msra.mxu0 0
    %288 = vmatprep.subr.bf16.mxu0 0
    %289 = vmatpush1.bf16.msra.mxu0 0
    %290 = vmatprep.subr.bf16.mxu0 0
    %291 = vmatpush1.bf16.msra.mxu0 0
    %292 = vmatprep.subr.bf16.mxu0 0
    %293 = vmatpush1.bf16.msra.mxu0 0
    %294 = vmatprep.subr.bf16.mxu0 %v173
    %295 = vmatpush1.bf16.msra.mxu0 %v172
    %296 = vmatprep.subr.bf16.mxu0 0
    %297 = vmatpush2.bf16.msra.mxu0 0
    %298 = vmatprep.subr.bf16.mxu0 0
    %299 = vmatpush2.bf16.msra.mxu0 0
    %300 = vmatprep.subr.bf16.mxu0 0
    %301 = vmatpush2.bf16.msra.mxu0 0
    %302 = vmatprep.subr.bf16.mxu0 0
    %303 = vmatpush2.bf16.msra.mxu0 0
    %304 = vmatprep.subr.bf16.mxu0 0
    %305 = vmatpush2.bf16.msra.mxu0 0
    %306 = vmatprep.subr.bf16.mxu0 0
    %307 = vmatpush2.bf16.msra.mxu0 0
    %308 = vmatprep.subr.bf16.mxu0 0
    %309 = vmatpush2.bf16.msra.mxu0 0
    %310 = vmatprep.subr.bf16.mxu0 0
    %311 = vmatpush2.bf16.msra.mxu0 0
    %312 = vmatprep.mubr.bf16.mxu0 0
    %313 = vmatmul.mubr.bf16.gmra.mxu0 %v196
    %v314 = vpop.f32.mrf.mxu0
    %v315 = vadd.f32 %v65, %v314
    %v316 = vpop.f32.mrf.mxu0
    %v317 = vadd.f32 %v69, %v316
    %v318 = vpop.f32.mrf.mxu0
    %v319 = vadd.f32 %v65, %v318
    %v320 = vpop.f32.mrf.mxu0
    %v321 = vadd.f32 %v69, %v320
    %322 = vmatprep.mubr.bf16.mxu0 0
    %323 = vmatmul.mubr.bf16.gmra.mxu0 %v199
    %v324 = vpop.f32.mrf.mxu0
    %v325 = vadd.f32 %v65, %v324
    %v326 = vpop.f32.mrf.mxu0
    %v327 = vadd.f32 %v69, %v326
    %v328 = vpop.f32.mrf.mxu0
    %v329 = vadd.f32 %v65, %v328
    %v330 = vpop.f32.mrf.mxu0
    %v331 = vadd.f32 %v69, %v330
    %332 = vmatprep.mubr.bf16.mxu0 0
    %333 = vmatmul.mubr.bf16.gmra.mxu0 %v202
    %v334 = vpop.f32.mrf.mxu0
    %v335 = vadd.f32 %v65, %v334
    %v336 = vpop.f32.mrf.mxu0
    %v337 = vadd.f32 %v69, %v336
    %v338 = vpop.f32.mrf.mxu0
    %v339 = vadd.f32 %v65, %v338
    %v340 = vpop.f32.mrf.mxu0
    %v341 = vadd.f32 %v69, %v340
    %342 = vmatprep.mubr.bf16.mxu0 0
    %343 = vmatmul.mubr.bf16.gmra.mxu0 %v205
    %v344 = vpop.f32.mrf.mxu0
    %v345 = vadd.f32 %v65, %v344
    %v346 = vpop.f32.mrf.mxu0
    %v347 = vadd.f32 %v69, %v346
    %v348 = vpop.f32.mrf.mxu0
    %v349 = vadd.f32 %v65, %v348
    %v350 = vpop.f32.mrf.mxu0
    %v351 = vadd.f32 %v69, %v350
    %352 = vdwg.mxu0
    %353 = vmatprep.subr.bf16.mxu0 0
    %354 = vmatpush1.bf16.msra.mxu0 0
    %355 = vmatprep.subr.bf16.mxu0 0
    %356 = vmatpush1.bf16.msra.mxu0 0
    %357 = vmatprep.subr.bf16.mxu0 0
    %358 = vmatpush1.bf16.msra.mxu0 0
    %359 = vmatprep.subr.bf16.mxu0 0
    %360 = vmatpush1.bf16.msra.mxu0 0
    %361 = vmatprep.subr.bf16.mxu0 0
    %362 = vmatpush1.bf16.msra.mxu0 0
    %363 = vmatprep.subr.bf16.mxu0 0
    %364 = vmatpush1.bf16.msra.mxu0 0
    %365 = vmatprep.subr.bf16.mxu0 0
    %366 = vmatpush1.bf16.msra.mxu0 0
    %367 = vmatprep.subr.bf16.mxu0 %v175
    %368 = vmatpush1.bf16.msra.mxu0 %v174
    %369 = vmatprep.subr.bf16.mxu0 0
    %370 = vmatpush2.bf16.msra.mxu0 0
    %371 = vmatprep.subr.bf16.mxu0 0
    %372 = vmatpush2.bf16.msra.mxu0 0
    %373 = vmatprep.subr.bf16.mxu0 0
    %374 = vmatpush2.bf16.msra.mxu0 0
    %375 = vmatprep.subr.bf16.mxu0 0
    %376 = vmatpush2.bf16.msra.mxu0 0
    %377 = vmatprep.subr.bf16.mxu0 0
    %378 = vmatpush2.bf16.msra.mxu0 0
    %379 = vmatprep.subr.bf16.mxu0 0
    %380 = vmatpush2.bf16.msra.mxu0 0
    %381 = vmatprep.subr.bf16.mxu0 0
    %382 = vmatpush2.bf16.msra.mxu0 0
    %383 = vmatprep.subr.bf16.mxu0 0
    %384 = vmatpush2.bf16.msra.mxu0 0
    %385 = vmatprep.mubr.bf16.mxu0 0
    %386 = vmatmul.mubr.bf16.gmra.mxu0 %v196
    %v387 = vpop.f32.mrf.mxu0
    %v388 = vadd.f32 %v73, %v387
    %v389 = vpop.f32.mrf.mxu0
    %v390 = vadd.f32 %v77, %v389
    %v391 = vpop.f32.mrf.mxu0
    %v392 = vadd.f32 %v73, %v391
    %v393 = vpop.f32.mrf.mxu0
    %v394 = vadd.f32 %v77, %v393
    %395 = vmatprep.mubr.bf16.mxu0 0
    %396 = vmatmul.mubr.bf16.gmra.mxu0 %v199
    %v397 = vpop.f32.mrf.mxu0
    %v398 = vadd.f32 %v73, %v397
    %v399 = vpop.f32.mrf.mxu0
    %v400 = vadd.f32 %v77, %v399
    %v401 = vpop.f32.mrf.mxu0
    %v402 = vadd.f32 %v73, %v401
    %v403 = vpop.f32.mrf.mxu0
    %v404 = vadd.f32 %v77, %v403
    %405 = vmatprep.mubr.bf16.mxu0 0
    %406 = vmatmul.mubr.bf16.gmra.mxu0 %v202
    %v407 = vpop.f32.mrf.mxu0
    %v408 = vadd.f32 %v73, %v407
    %v409 = vpop.f32.mrf.mxu0
    %v410 = vadd.f32 %v77, %v409
    %v411 = vpop.f32.mrf.mxu0
    %v412 = vadd.f32 %v73, %v411
    %v413 = vpop.f32.mrf.mxu0
    %v414 = vadd.f32 %v77, %v413
    %415 = vmatprep.mubr.bf16.mxu0 0
    %416 = vmatmul.mubr.bf16.gmra.mxu0 %v205
    %v417 = vpop.f32.mrf.mxu0
    %v418 = vadd.f32 %v73, %v417
    %v419 = vpop.f32.mrf.mxu0
    %v420 = vadd.f32 %v77, %v419
    %v421 = vpop.f32.mrf.mxu0
    %v422 = vadd.f32 %v73, %v421
    %v423 = vpop.f32.mrf.mxu0
    %v424 = vadd.f32 %v77, %v423
    %425 = vdwg.mxu0
    %426 = vmatprep.subr.bf16.mxu0 0
    %427 = vmatpush1.bf16.msra.mxu0 0
    %428 = vmatprep.subr.bf16.mxu0 0
    %429 = vmatpush1.bf16.msra.mxu0 0
    %430 = vmatprep.subr.bf16.mxu0 0
    %431 = vmatpush1.bf16.msra.mxu0 0
    %432 = vmatprep.subr.bf16.mxu0 0
    %433 = vmatpush1.bf16.msra.mxu0 0
    %434 = vmatprep.subr.bf16.mxu0 0
    %435 = vmatpush1.bf16.msra.mxu0 0
    %436 = vmatprep.subr.bf16.mxu0 0
    %437 = vmatpush1.bf16.msra.mxu0 0
    %438 = vmatprep.subr.bf16.mxu0 0
    %439 = vmatpush1.bf16.msra.mxu0 0
    %440 = vmatprep.subr.bf16.mxu0 %v177
    %441 = vmatpush1.bf16.msra.mxu0 %v176
    %442 = vmatprep.subr.bf16.mxu0 0
    %443 = vmatpush2.bf16.msra.mxu0 0
    %444 = vmatprep.subr.bf16.mxu0 0
    %445 = vmatpush2.bf16.msra.mxu0 0
    %446 = vmatprep.subr.bf16.mxu0 0
    %447 = vmatpush2.bf16.msra.mxu0 0
    %448 = vmatprep.subr.bf16.mxu0 0
    %449 = vmatpush2.bf16.msra.mxu0 0
    %450 = vmatprep.subr.bf16.mxu0 0
    %451 = vmatpush2.bf16.msra.mxu0 0
    %452 = vmatprep.subr.bf16.mxu0 0
    %453 = vmatpush2.bf16.msra.mxu0 0
    %454 = vmatprep.subr.bf16.mxu0 0
    %455 = vmatpush2.bf16.msra.mxu0 0
    %456 = vmatprep.subr.bf16.mxu0 0
    %457 = vmatpush2.bf16.msra.mxu0 0
    %458 = vmatprep.mubr.bf16.mxu0 0
    %459 = vmatmul.mubr.bf16.gmra.mxu0 %v196
    %v460 = vpop.f32.mrf.mxu0
    %v461 = vadd.f32 %v81, %v460
    %v462 = vpop.f32.mrf.mxu0
    %v463 = vadd.f32 %v85, %v462
    %v464 = vpop.f32.mrf.mxu0
    %v465 = vadd.f32 %v81, %v464
    %v466 = vpop.f32.mrf.mxu0
    %v467 = vadd.f32 %v85, %v466
    %468 = vmatprep.mubr.bf16.mxu0 0
    %469 = vmatmul.mubr.bf16.gmra.mxu0 %v199
    %v470 = vpop.f32.mrf.mxu0
    %v471 = vadd.f32 %v81, %v470
    %v472 = vpop.f32.mrf.mxu0
    %v473 = vadd.f32 %v85, %v472
    %v474 = vpop.f32.mrf.mxu0
    %v475 = vadd.f32 %v81, %v474
    %v476 = vpop.f32.mrf.mxu0
    %v477 = vadd.f32 %v85, %v476
    %478 = vmatprep.mubr.bf16.mxu0 0
    %479 = vmatmul.mubr.bf16.gmra.mxu0 %v202
    %v480 = vpop.f32.mrf.mxu0
    %v481 = vadd.f32 %v81, %v480
    %v482 = vpop.f32.mrf.mxu0
    %v483 = vadd.f32 %v85, %v482
    %v484 = vpop.f32.mrf.mxu0
    %v485 = vadd.f32 %v81, %v484
    %v486 = vpop.f32.mrf.mxu0
    %v487 = vadd.f32 %v85, %v486
    %488 = vmatprep.mubr.bf16.mxu0 0
    %489 = vmatmul.mubr.bf16.gmra.mxu0 %v205
    %v490 = vpop.f32.mrf.mxu0
    %v491 = vadd.f32 %v81, %v490
    %v492 = vpop.f32.mrf.mxu0
    %v493 = vadd.f32 %v85, %v492
    %v494 = vpop.f32.mrf.mxu0
    %v495 = vadd.f32 %v81, %v494
    %v496 = vpop.f32.mrf.mxu0
    %v497 = vadd.f32 %v85, %v496
    %498 = vdwg.mxu0
    %499 = vmatprep.subr.bf16.mxu0 0
    %500 = vmatpush1.bf16.msra.mxu0 0
    %501 = vmatprep.subr.bf16.mxu0 0
    %502 = vmatpush1.bf16.msra.mxu0 0
    %503 = vmatprep.subr.bf16.mxu0 0
    %504 = vmatpush1.bf16.msra.mxu0 0
    %505 = vmatprep.subr.bf16.mxu0 0
    %506 = vmatpush1.bf16.msra.mxu0 0
    %507 = vmatprep.subr.bf16.mxu0 0
    %508 = vmatpush1.bf16.msra.mxu0 0
    %509 = vmatprep.subr.bf16.mxu0 0
    %510 = vmatpush1.bf16.msra.mxu0 0
    %511 = vmatprep.subr.bf16.mxu0 0
    %512 = vmatpush1.bf16.msra.mxu0 0
    %513 = vmatprep.subr.bf16.mxu0 %v179
    %514 = vmatpush1.bf16.msra.mxu0 %v178
    %515 = vmatprep.subr.bf16.mxu0 0
    %516 = vmatpush2.bf16.msra.mxu0 0
    %517 = vmatprep.subr.bf16.mxu0 0
    %518 = vmatpush2.bf16.msra.mxu0 0
    %519 = vmatprep.subr.bf16.mxu0 0
    %520 = vmatpush2.bf16.msra.mxu0 0
    %521 = vmatprep.subr.bf16.mxu0 0
    %522 = vmatpush2.bf16.msra.mxu0 0
    %523 = vmatprep.subr.bf16.mxu0 0
    %524 = vmatpush2.bf16.msra.mxu0 0
    %525 = vmatprep.subr.bf16.mxu0 0
    %526 = vmatpush2.bf16.msra.mxu0 0
    %527 = vmatprep.subr.bf16.mxu0 0
    %528 = vmatpush2.bf16.msra.mxu0 0
    %529 = vmatprep.subr.bf16.mxu0 0
    %530 = vmatpush2.bf16.msra.mxu0 0
    %531 = vmatprep.mubr.bf16.mxu0 0
    %532 = vmatmul.mubr.bf16.gmra.mxu0 %v196
    %v533 = vpop.f32.mrf.mxu0
    %v534 = vadd.f32 %v89, %v533
    %v535 = vpop.f32.mrf.mxu0
    %v536 = vadd.f32 %v93, %v535
    %v537 = vpop.f32.mrf.mxu0
    %v538 = vadd.f32 %v89, %v537
    %v539 = vpop.f32.mrf.mxu0
    %v540 = vadd.f32 %v93, %v539
    %541 = vmatprep.mubr.bf16.mxu0 0
    %542 = vmatmul.mubr.bf16.gmra.mxu0 %v199
    %v543 = vpop.f32.mrf.mxu0
    %v544 = vadd.f32 %v89, %v543
    %v545 = vpop.f32.mrf.mxu0
    %v546 = vadd.f32 %v93, %v545
    %v547 = vpop.f32.mrf.mxu0
    %v548 = vadd.f32 %v89, %v547
    %v549 = vpop.f32.mrf.mxu0
    %v550 = vadd.f32 %v93, %v549
    %551 = vmatprep.mubr.bf16.mxu0 0
    %552 = vmatmul.mubr.bf16.gmra.mxu0 %v202
    %v553 = vpop.f32.mrf.mxu0
    %v554 = vadd.f32 %v89, %v553
    %v555 = vpop.f32.mrf.mxu0
    %v556 = vadd.f32 %v93, %v555
    %v557 = vpop.f32.mrf.mxu0
    %v558 = vadd.f32 %v89, %v557
    %v559 = vpop.f32.mrf.mxu0
    %v560 = vadd.f32 %v93, %v559
    %561 = vmatprep.mubr.bf16.mxu0 0
    %562 = vmatmul.mubr.bf16.gmra.mxu0 %v205
    %v563 = vpop.f32.mrf.mxu0
    %v564 = vadd.f32 %v89, %v563
    %v565 = vpop.f32.mrf.mxu0
    %v566 = vadd.f32 %v93, %v565
    %v567 = vpop.f32.mrf.mxu0
    %v568 = vadd.f32 %v89, %v567
    %v569 = vpop.f32.mrf.mxu0
    %v570 = vadd.f32 %v93, %v569
    %571 = vdwg.mxu0
    %572 = vmatprep.subr.bf16.mxu0 0
    %573 = vmatpush1.bf16.msra.mxu0 0
    %574 = vmatprep.subr.bf16.mxu0 0
    %575 = vmatpush1.bf16.msra.mxu0 0
    %576 = vmatprep.subr.bf16.mxu0 0
    %577 = vmatpush1.bf16.msra.mxu0 0
    %578 = vmatprep.subr.bf16.mxu0 0
    %579 = vmatpush1.bf16.msra.mxu0 0
    %580 = vmatprep.subr.bf16.mxu0 0
    %581 = vmatpush1.bf16.msra.mxu0 0
    %582 = vmatprep.subr.bf16.mxu0 0
    %583 = vmatpush1.bf16.msra.mxu0 0
    %584 = vmatprep.subr.bf16.mxu0 0
    %585 = vmatpush1.bf16.msra.mxu0 0
    %586 = vmatprep.subr.bf16.mxu0 %v181
    %587 = vmatpush1.bf16.msra.mxu0 %v180
    %588 = vmatprep.subr.bf16.mxu0 0
    %589 = vmatpush2.bf16.msra.mxu0 0
    %590 = vmatprep.subr.bf16.mxu0 0
    %591 = vmatpush2.bf16.msra.mxu0 0
    %592 = vmatprep.subr.bf16.mxu0 0
    %593 = vmatpush2.bf16.msra.mxu0 0
    %594 = vmatprep.subr.bf16.mxu0 0
    %595 = vmatpush2.bf16.msra.mxu0 0
    %596 = vmatprep.subr.bf16.mxu0 0
    %597 = vmatpush2.bf16.msra.mxu0 0
    %598 = vmatprep.subr.bf16.mxu0 0
    %599 = vmatpush2.bf16.msra.mxu0 0
    %600 = vmatprep.subr.bf16.mxu0 0
    %601 = vmatpush2.bf16.msra.mxu0 0
    %602 = vmatprep.subr.bf16.mxu0 0
    %603 = vmatpush2.bf16.msra.mxu0 0
    %604 = vmatprep.mubr.bf16.mxu0 0
    %605 = vmatmul.mubr.bf16.gmra.mxu0 %v196
    %v606 = vpop.f32.mrf.mxu0
    %v607 = vadd.f32 %v97, %v606
    %v608 = vpop.f32.mrf.mxu0
    %v609 = vadd.f32 %v101, %v608
    %v610 = vpop.f32.mrf.mxu0
    %v611 = vadd.f32 %v97, %v610
    %v612 = vpop.f32.mrf.mxu0
    %v613 = vadd.f32 %v101, %v612
    %614 = vmatprep.mubr.bf16.mxu0 0
    %615 = vmatmul.mubr.bf16.gmra.mxu0 %v199
    %v616 = vpop.f32.mrf.mxu0
    %v617 = vadd.f32 %v97, %v616
    %v618 = vpop.f32.mrf.mxu0
    %v619 = vadd.f32 %v101, %v618
    %v620 = vpop.f32.mrf.mxu0
    %v621 = vadd.f32 %v97, %v620
    %v622 = vpop.f32.mrf.mxu0
    %v623 = vadd.f32 %v101, %v622
    %624 = vmatprep.mubr.bf16.mxu0 0
    %625 = vmatmul.mubr.bf16.gmra.mxu0 %v202
    %v626 = vpop.f32.mrf.mxu0
    %v627 = vadd.f32 %v97, %v626
    %v628 = vpop.f32.mrf.mxu0
    %v629 = vadd.f32 %v101, %v628
    %v630 = vpop.f32.mrf.mxu0
    %v631 = vadd.f32 %v97, %v630
    %v632 = vpop.f32.mrf.mxu0
    %v633 = vadd.f32 %v101, %v632
    %634 = vmatprep.mubr.bf16.mxu0 0
    %635 = vmatmul.mubr.bf16.gmra.mxu0 %v205
    %v636 = vpop.f32.mrf.mxu0
    %v637 = vadd.f32 %v97, %v636
    %v638 = vpop.f32.mrf.mxu0
    %v639 = vadd.f32 %v101, %v638
    %v640 = vpop.f32.mrf.mxu0
    %v641 = vadd.f32 %v97, %v640
    %v642 = vpop.f32.mrf.mxu0
    %v643 = vadd.f32 %v101, %v642
    %644 = vdwg.mxu0
    %645 = vst [vmem:[#allocation5] sm:$0xff] %v242
    %646 = vst [vmem:[#allocation5 + $0x8] sm:$0xff] %v244
    %647 = vst [vmem:[#allocation5 + $0x10] sm:$0xff] %v315
    %648 = vst [vmem:[#allocation5 + $0x18] sm:$0xff] %v317
    %649 = vst [vmem:[#allocation5 + $0x20] sm:$0xff] %v388
    %650 = vst [vmem:[#allocation5 + $0x28] sm:$0xff] %v390
    %651 = vst [vmem:[#allocation5 + $0x30] sm:$0xff] %v461
    %652 = vst [vmem:[#allocation5 + $0x38] sm:$0xff] %v463
    %653 = vst [vmem:[#allocation5 + $0x40] sm:$0xff] %v534
    %654 = vst [vmem:[#allocation5 + $0x48] sm:$0xff] %v536
    %655 = vst [vmem:[#allocation5 + $0x50] sm:$0xff] %v607
    %656 = vst [vmem:[#allocation5 + $0x58] sm:$0xff] %v609
    %657 = vst [vmem:[#allocation5 + $0x60] sm:$0xff] %v246
    %658 = vst [vmem:[#allocation5 + $0x68] sm:$0xff] %v248
    %659 = vst [vmem:[#allocation5 + $0x70] sm:$0xff] %v319
    %660 = vst [vmem:[#allocation5 + $0x78] sm:$0xff] %v321
    %661 = vst [vmem:[#allocation5 + $0x80] sm:$0xff] %v392
    %662 = vst [vmem:[#allocation5 + $0x88] sm:$0xff] %v394
    %663 = vst [vmem:[#allocation5 + $0x90] sm:$0xff] %v465
    %664 = vst [vmem:[#allocation5 + $0x98] sm:$0xff] %v467
    %665 = vst [vmem:[#allocation5 + $0xa0] sm:$0xff] %v538
    %666 = vst [vmem:[#allocation5 + $0xa8] sm:$0xff] %v540
    %667 = vst [vmem:[#allocation5 + $0xb0] sm:$0xff] %v611
    %668 = vst [vmem:[#allocation5 + $0xb8] sm:$0xff] %v613
    %669 = vst [vmem:[#allocation5 + $0xc0] sm:$0xff] %v252
    %670 = vst [vmem:[#allocation5 + $0xc8] sm:$0xff] %v254
    %671 = vst [vmem:[#allocation5 + $0xd0] sm:$0xff] %v325
    %672 = vst [vmem:[#allocation5 + $0xd8] sm:$0xff] %v327
    %673 = vst [vmem:[#allocation5 + $0xe0] sm:$0xff] %v398
    %674 = vst [vmem:[#allocation5 + $0xe8] sm:$0xff] %v400
    %675 = vst [vmem:[#allocation5 + $0xf0] sm:$0xff] %v471
    %676 = vst [vmem:[#allocation5 + $0xf8] sm:$0xff] %v473
    %677 = vst [vmem:[#allocation5 + $0x100] sm:$0xff] %v544
    %678 = vst [vmem:[#allocation5 + $0x108] sm:$0xff] %v546
    %679 = vst [vmem:[#allocation5 + $0x110] sm:$0xff] %v617
    %680 = vst [vmem:[#allocation5 + $0x118] sm:$0xff] %v619
    %681 = vst [vmem:[#allocation5 + $0x120] sm:$0xff] %v256
    %682 = vst [vmem:[#allocation5 + $0x128] sm:$0xff] %v258
    %683 = vst [vmem:[#allocation5 + $0x130] sm:$0xff] %v329
    %684 = vst [vmem:[#allocation5 + $0x138] sm:$0xff] %v331
    %685 = vst [vmem:[#allocation5 + $0x140] sm:$0xff] %v402
    %686 = vst [vmem:[#allocation5 + $0x148] sm:$0xff] %v404
    %687 = vst [vmem:[#allocation5 + $0x150] sm:$0xff] %v475
    %688 = vst [vmem:[#allocation5 + $0x158] sm:$0xff] %v477
    %689 = vst [vmem:[#allocation5 + $0x160] sm:$0xff] %v548
    %690 = vst [vmem:[#allocation5 + $0x168] sm:$0xff] %v550
    %691 = vst [vmem:[#allocation5 + $0x170] sm:$0xff] %v621
    %692 = vst [vmem:[#allocation5 + $0x178] sm:$0xff] %v623
    %693 = vst [vmem:[#allocation5 + $0x180] sm:$0xff] %v262
    %694 = vst [vmem:[#allocation5 + $0x188] sm:$0xff] %v264
    %695 = vst [vmem:[#allocation5 + $0x190] sm:$0xff] %v335
    %696 = vst [vmem:[#allocation5 + $0x198] sm:$0xff] %v337
    %697 = vst [vmem:[#allocation5 + $0x1a0] sm:$0xff] %v408
    %698 = vst [vmem:[#allocation5 + $0x1a8] sm:$0xff] %v410
    %699 = vst [vmem:[#allocation5 + $0x1b0] sm:$0xff] %v481
    %700 = vst [vmem:[#allocation5 + $0x1b8] sm:$0xff] %v483
    %701 = vst [vmem:[#allocation5 + $0x1c0] sm:$0xff] %v554
    %702 = vst [vmem:[#allocation5 + $0x1c8] sm:$0xff] %v556
    %703 = vst [vmem:[#allocation5 + $0x1d0] sm:$0xff] %v627
    %704 = vst [vmem:[#allocation5 + $0x1d8] sm:$0xff] %v629
    %705 = vst [vmem:[#allocation5 + $0x1e0] sm:$0xff] %v266
    %706 = vst [vmem:[#allocation5 + $0x1e8] sm:$0xff] %v268
    %707 = vst [vmem:[#allocation5 + $0x1f0] sm:$0xff] %v339
    %708 = vst [vmem:[#allocation5 + $0x1f8] sm:$0xff] %v341
    %709 = vst [vmem:[#allocation5 + $0x200] sm:$0xff] %v412
    %710 = vst [vmem:[#allocation5 + $0x208] sm:$0xff] %v414
    %711 = vst [vmem:[#allocation5 + $0x210] sm:$0xff] %v485
    %712 = vst [vmem:[#allocation5 + $0x218] sm:$0xff] %v487
    %713 = vst [vmem:[#allocation5 + $0x220] sm:$0xff] %v558
    %714 = vst [vmem:[#allocation5 + $0x228] sm:$0xff] %v560
    %715 = vst [vmem:[#allocation5 + $0x230] sm:$0xff] %v631
    %716 = vst [vmem:[#allocation5 + $0x238] sm:$0xff] %v633
    %717 = vst [vmem:[#allocation5 + $0x240] sm:$0xff] %v272
    %718 = vst [vmem:[#allocation5 + $0x248] sm:$0xff] %v274
    %719 = vst [vmem:[#allocation5 + $0x250] sm:$0xff] %v345
    %720 = vst [vmem:[#allocation5 + $0x258] sm:$0xff] %v347
    %721 = vst [vmem:[#allocation5 + $0x260] sm:$0xff] %v418
    %722 = vst [vmem:[#allocation5 + $0x268] sm:$0xff] %v420
    %723 = vst [vmem:[#allocation5 + $0x270] sm:$0xff] %v491
    %724 = vst [vmem:[#allocation5 + $0x278] sm:$0xff] %v493
    %725 = vst [vmem:[#allocation5 + $0x280] sm:$0xff] %v564
    %726 = vst [vmem:[#allocation5 + $0x288] sm:$0xff] %v566
    %727 = vst [vmem:[#allocation5 + $0x290] sm:$0xff] %v637
    %728 = vst [vmem:[#allocation5 + $0x298] sm:$0xff] %v639
    %729 = vst [vmem:[#allocation5 + $0x2a0] sm:$0xff] %v276
    %730 = vst [vmem:[#allocation5 + $0x2a8] sm:$0xff] %v278
    %731 = vst [vmem:[#allocation5 + $0x2b0] sm:$0xff] %v349
    %732 = vst [vmem:[#allocation5 + $0x2b8] sm:$0xff] %v351
    %733 = vst [vmem:[#allocation5 + $0x2c0] sm:$0xff] %v422
    %734 = vst [vmem:[#allocation5 + $0x2c8] sm:$0xff] %v424
    %735 = vst [vmem:[#allocation5 + $0x2d0] sm:$0xff] %v495
    %736 = vst [vmem:[#allocation5 + $0x2d8] sm:$0xff] %v497
    %737 = vst [vmem:[#allocation5 + $0x2e0] sm:$0xff] %v568
    %738 = vst [vmem:[#allocation5 + $0x2e8] sm:$0xff] %v570
    %739 = vst [vmem:[#allocation5 + $0x2f0] sm:$0xff] %v641
    %740 = vst [vmem:[#allocation5 + $0x2f8] sm:$0xff] %v643
    // Predicated region
    $region18: #{tpu_custom_call.1} parent=1 // pred_check
      _
    $region19: #{tpu_custom_call.1} parent=1 // pred_check_branch
      %742 = sbr.rel (0) target = $region21
    $region20: #{tpu_custom_call.1} parent=1 // pred_region
      %s744 = ssub.s32 12288, 12288
      %745 = vsyncadd [#allocation4], %s744
      %s746 = sshll.u32 [#allocation5], 4
      %s747 = int_to_ptr.vmem [resolvable:$true] %s746
      %752 = dma.vmem_to_hbm [thread:$0]  %s747, 12288, %s3, [#allocation4], 1536, 1536, 96
    $region21: #{tpu_custom_call.1} parent=1 // pred_fallthru
      _
    // Predicated region
    $region22: #{tpu_custom_call.1} parent=1 // pred_check
      _
    $region23: #{tpu_custom_call.1} parent=1 // pred_check_branch
      %754 = sbr.rel (0) target = $region25
    $region24: #{tpu_custom_call.1} parent=1 // pred_region
      %755 = dma.done [#allocation4], 12288
    $region25: #{tpu_custom_call.1} parent=1 // pred_fallthru
      _
    %756 = vsyncpa [#allocation3], 1
    %757 = vsyncpa [#allocation4], 1

</llo_original>
